<compile_context>
chip_gen: v5e
topology: v5e:2x2
jax: 0.10.0
libtpu: 0.0.40
codegen_flags: <defaults>
</compile_context>

<pallas_src>
import functools

import jax
import jax.numpy as jnp
from jax import lax
from jax.experimental import pallas as pl
from jax.experimental.pallas import tpu as pltpu


LANES = 1024          # lane-dense last dim (multiple of 128)
MAX_TILE_ROWS = 512   # (512, 1024) f32 = 2 MiB per input block
NCORES = 2            # leading 'parallel' grid axis (v7x megacore split)


def _focal_loss_kernel(x_ref, t_ref, out_ref, *, gamma, alpha, n_valid):
    i = pl.program_id(1)
    tile_rows, lanes = x_ref.shape

    # Zero the resident (1, 8, LANES) accumulator at the start of each core's pass.
    @pl.when(i == 0)
    def _():
        out_ref[...] = jnp.zeros_like(out_ref)

    eps = 1e-9
    x = jnp.clip(x_ref[...].astype(jnp.float32), eps, 1.0 - eps)
    t = jnp.clip(t_ref[...].astype(jnp.float32), eps, 1.0 - eps)

    ce = t * jnp.log(x)                      # 1 EUP op / element
    q = 1.0 - x
    if gamma == 2.0:
        w = q * q                            # VPU square, avoids pow -> exp+log on EUP
    elif gamma == 1.0:
        w = q
    else:
        w = q ** jnp.float32(gamma)          # general fallback
    loss = (-alpha) * (t * w) * ce

    # In-kernel mask for the zero-padded tail (no mask tensor streamed from HBM).
    # NOTE: int32 flat index; assumes < 2**31 total elements.
    block_idx = pl.program_id(0) * pl.num_programs(1) + i
    row = lax.broadcasted_iota(jnp.int32, (tile_rows, lanes), 0) + block_idx * tile_rows
    col = lax.broadcasted_iota(jnp.int32, (tile_rows, lanes), 1)
    loss = jnp.where(row * lanes + col < n_valid, loss, 0.0)

    # Per-vreg-row partial sums: layout-preserving reshape + leading-axis sum,
    # i.e. pure VPU vector adds; no cross-lane reduce inside the loop.
    partial = jnp.sum(loss.reshape(tile_rows // 8, 8, lanes), axis=0)
    out_ref[0, :, :] = out_ref[0, :, :] + partial


def focal_loss(inp, target, gamma=2.0, alpha=0.25):
    """Pallas implementation of FocalLoss.forward (returns scalar f32)."""
    assert inp.shape == target.shape, "input/target must have the same shape"
    n = int(inp.size)  # denominator of .mean() over all elements

    # Layout is irrelevant for elementwise + global mean: skip the torch
    # view/transpose/view and go straight to a lane-dense 2D view.
    x_flat = inp.reshape(-1)
    t_flat = target.reshape(-1)  # keep native dtype; upcast inside the kernel

    rows = pl.cdiv(n, LANES)
    tile_rows = min(MAX_TILE_ROWS, max(8, ((pl.cdiv(rows, NCORES) + 7) // 8) * 8))
    rows_padded = pl.cdiv(rows, tile_rows * NCORES) * tile_rows * NCORES
    tiles_per_core = rows_padded // (tile_rows * NCORES)
    n_padded = rows_padded * LANES

    if n_padded != n:
        x_flat = jnp.pad(x_flat, (0, n_padded - n))
        t_flat = jnp.pad(t_flat, (0, n_padded - n))
    x2 = x_flat.reshape(rows_padded, LANES)
    t2 = t_flat.reshape(rows_padded, LANES)

    kernel = functools.partial(
        _focal_loss_kernel, gamma=float(gamma), alpha=float(alpha), n_valid=n
    )

    in_map = lambda p, i: (p * tiles_per_core + i, 0)

    bytes_in = int(x2.size * x2.dtype.itemsize + t2.size * t2.dtype.itemsize)
    cost = pl.CostEstimate(
        flops=8 * n,
        transcendentals=n,
        bytes_accessed=bytes_in + NCORES * 8 * LANES * 4,
    )

    partials = pl.pallas_call(
        kernel,
        out_shape=jax.ShapeDtypeStruct((NCORES, 8, LANES), jnp.float32),
        grid_spec=pltpu.PrefetchScalarGridSpec(
            num_scalar_prefetch=0,
            grid=(NCORES, tiles_per_core),
            in_specs=[
                pl.BlockSpec((tile_rows, LANES), in_map),
                pl.BlockSpec((tile_rows, LANES), in_map),
            ],
            out_specs=pl.BlockSpec((1, 8, LANES), lambda p, i: (p, 0, 0)),
        ),
        compiler_params=pltpu.CompilerParams(
            dimension_semantics=("parallel", "arbitrary"),
        ),
        cost_estimate=cost,
    )(x2, t2)

    return jnp.sum(partials) / jnp.float32(n)


def _focal_loss_ref(inp, target, gamma=2.0, alpha=0.25):
    """Pure-JAX reference mirroring the PyTorch forward (mean over all elements)."""
    eps = 1e-9
    x = jnp.clip(inp.astype(jnp.float32), eps, 1.0 - eps)
    t = jnp.clip(target.astype(jnp.float32), eps, 1.0 - eps)
    ce = t * jnp.log(x)
    weight = t * (1.0 - x) ** gamma
    loss = -alpha * weight * ce
    return jnp.mean(loss)


if __name__ == "__main__":
    key = jax.random.PRNGKey(0)
    k1, k2 = jax.random.split(key)

    # NCHW probabilities and one-hot targets: batch=2, channels=4, 16x16
    x = jax.random.uniform(k1, (2, 4, 16, 16), dtype=jnp.float32)
    labels = jax.random.randint(k2, (2, 16, 16), 0, 4)
    target = jax.nn.one_hot(labels, 4, dtype=jnp.float32)   # (B, H, W, C)
    target = jnp.transpose(target, (0, 3, 1, 2))            # -> NCHW

    loss = focal_loss(x, target)
    jax.block_until_ready(loss)

    ref = _focal_loss_ref(x, target)
    assert jnp.allclose(loss, ref, rtol=1e-5, atol=1e-6), (loss, ref)

    print("KERNEL_OK")
</pallas_src>

<mosaic_0001>
module attributes {stable_mosaic.version = 11 : i64} {
  func.func @_focal_loss_kernel(%arg0: i32, %arg1: i32, %arg2: memref<8x1024xf32, #tpu.memory_space<vmem>>, %arg3: memref<8x1024xf32, #tpu.memory_space<vmem>>, %arg4: memref<1x8x1024xf32, #tpu.memory_space<vmem>>) attributes {dimension_semantics = [#tpu.dimension_semantics<parallel>, #tpu.dimension_semantics<arbitrary>], iteration_bounds = array<i64: 2, 1>, scalar_prefetch = 0 : i64, scratch_operands = 0 : i64, tpu.core_type = #tpu.core_type<tc>, window_params = [{transform_indices = @transform_0, window_bounds = array<i64: 8, 1024>}, {transform_indices = @transform_1, window_bounds = array<i64: 8, 1024>}, {transform_indices = @transform_2, window_bounds = array<i64: 1, 8, 1024>}]} {
    %c0_i32 = arith.constant 0 : i32
    %0 = arith.cmpi eq, %arg1, %c0_i32 : i32
    %1 = arith.extui %0 : i1 to i32
    %c0_i32_0 = arith.constant 0 : i32
    %2 = arith.cmpi ne, %1, %c0_i32_0 : i32
    scf.if %2 {
      %cst_17 = arith.constant 0.000000e+00 : f32
      %44 = vector.broadcast %cst_17 : f32 to vector<1x8x1024xf32>
      %c0_18 = arith.constant 0 : index
      %c0_19 = arith.constant 0 : index
      %c0_20 = arith.constant 0 : index
      %45 = vector.load %arg4[%c0_18, %c0_19, %c0_20] : memref<1x8x1024xf32, #tpu.memory_space<vmem>>, vector<1x8x1024xf32>
      tpu.vector_store %arg4[%c0_18, %c0_19, %c0_20], %44 {strides = array<i32>} : memref<1x8x1024xf32, #tpu.memory_space<vmem>>, vector<1x8x1024xf32>,
    } else {
    }
    %c0 = arith.constant 0 : index
    %c0_1 = arith.constant 0 : index
    %3 = vector.load %arg2[%c0, %c0_1] : memref<8x1024xf32, #tpu.memory_space<vmem>>, vector<8x1024xf32>
    %cst = arith.constant 9.99999971E-10 : f32
    %cst_2 = arith.constant 1.000000e+00 : f32
    %4 = vector.broadcast %cst : f32 to vector<8x1024xf32>
    %5 = arith.maximumf %4, %3 : vector<8x1024xf32>
    %6 = vector.broadcast %cst_2 : f32 to vector<8x1024xf32>
    %7 = arith.minimumf %6, %5 : vector<8x1024xf32>
    %c0_3 = arith.constant 0 : index
    %c0_4 = arith.constant 0 : index
    %8 = vector.load %arg3[%c0_3, %c0_4] : memref<8x1024xf32, #tpu.memory_space<vmem>>, vector<8x1024xf32>
    %cst_5 = arith.constant 9.99999971E-10 : f32
    %cst_6 = arith.constant 1.000000e+00 : f32
    %9 = vector.broadcast %cst_5 : f32 to vector<8x1024xf32>
    %10 = arith.maximumf %9, %8 : vector<8x1024xf32>
    %11 = vector.broadcast %cst_6 : f32 to vector<8x1024xf32>
    %12 = arith.minimumf %11, %10 : vector<8x1024xf32>
    %13 = math.log %7 : vector<8x1024xf32>
    %14 = arith.mulf %12, %13 : vector<8x1024xf32>
    %cst_7 = arith.constant 1.000000e+00 : f32
    %15 = vector.broadcast %cst_7 : f32 to vector<8x1024xf32>
    %16 = arith.subf %15, %7 : vector<8x1024xf32>
    %17 = arith.mulf %16, %16 : vector<8x1024xf32>
    %18 = arith.mulf %12, %17 : vector<8x1024xf32>
    %cst_8 = arith.constant -2.500000e-01 : f32
    %19 = vector.broadcast %cst_8 : f32 to vector<8x1024xf32>
    %20 = arith.mulf %19, %18 : vector<8x1024xf32>
    %21 = arith.mulf %20, %14 : vector<8x1024xf32>
    %c1_i32 = arith.constant 1 : i32
    %22 = arith.muli %arg0, %c1_i32 : i32
    %23 = arith.addi %22, %arg1 : i32
    %24 = tpu.iota {dimensions = array<i32: 0>} : vector<8x1024xi32>
    %c8_i32 = arith.constant 8 : i32
    %25 = arith.muli %23, %c8_i32 : i32
    %26 = vector.broadcast %25 : i32 to vector<8x1024xi32>
    %27 = arith.addi %24, %26 : vector<8x1024xi32>
    %28 = tpu.iota {dimensions = array<i32: 1>} : vector<8x1024xi32>
    %c1024_i32 = arith.constant 1024 : i32
    %29 = vector.broadcast %c1024_i32 : i32 to vector<8x1024xi32>
    %30 = arith.muli %27, %29 : vector<8x1024xi32>
    %31 = arith.addi %30, %28 : vector<8x1024xi32>
    %c2048_i32 = arith.constant 2048 : i32
    %32 = vector.broadcast %c2048_i32 : i32 to vector<8x1024xi32>
    %33 = arith.cmpi slt, %31, %32 : vector<8x1024xi32>
    %cst_9 = arith.constant 0.000000e+00 : f32
    %34 = vector.broadcast %cst_9 : f32 to vector<8x1024xf32>
    %35 = arith.select %33, %21, %34 : vector<8x1024xi1>, vector<8x1024xf32>
    %36 = vector.shape_cast %35 : vector<8x1024xf32> to vector<1x8x1024xf32>
    %cst_10 = arith.constant dense<0.000000e+00> : vector<8x1024xf32>
    %37 = vector.multi_reduction <add>, %36, %cst_10 [0] : vector<1x8x1024xf32> to vector<8x1024xf32>
    %c0_11 = arith.constant 0 : index
    %c0_12 = arith.constant 0 : index
    %c0_13 = arith.constant 0 : index
    %38 = vector.load %arg4[%c0_11, %c0_12, %c0_13] : memref<1x8x1024xf32, #tpu.memory_space<vmem>>, vector<1x8x1024xf32>
    %39 = vector.shape_cast %38 : vector<1x8x1024xf32> to vector<8x1024xf32>
    %40 = arith.addf %39, %37 : vector<8x1024xf32>
    %c0_14 = arith.constant 0 : index
    %c0_15 = arith.constant 0 : index
    %c0_16 = arith.constant 0 : index
    %41 = vector.load %arg4[%c0_14, %c0_15, %c0_16] : memref<1x8x1024xf32, #tpu.memory_space<vmem>>, vector<1x8x1024xf32>
    %42 = vector.shape_cast %41 : vector<1x8x1024xf32> to vector<8x1024xf32>
    %43 = vector.shape_cast %40 : vector<8x1024xf32> to vector<1x8x1024xf32>
    tpu.vector_store %arg4[%c0_14, %c0_15, %c0_16], %43 {strides = array<i32>} : memref<1x8x1024xf32, #tpu.memory_space<vmem>>, vector<1x8x1024xf32>,
    return
  }
  func.func @transform_0(%arg0: i32, %arg1: i32) -> (i32, i32) {
    %c1_i32 = arith.constant 1 : i32
    %0 = arith.muli %arg0, %c1_i32 : i32
    %1 = arith.addi %0, %arg1 : i32
    %c0_i32 = arith.constant 0 : i32
    %c0_i32_0 = arith.constant 0 : i32
    return %1, %c0_i32 : i32, i32
  }
  func.func @transform_1(%arg0: i32, %arg1: i32) -> (i32, i32) {
    %c1_i32 = arith.constant 1 : i32
    %0 = arith.muli %arg0, %c1_i32 : i32
    %1 = arith.addi %0, %arg1 : i32
    %c0_i32 = arith.constant 0 : i32
    %c0_i32_0 = arith.constant 0 : i32
    return %1, %c0_i32 : i32, i32
  }
  func.func @transform_2(%arg0: i32, %arg1: i32) -> (i32, i32, i32) {
    %c0_i32 = arith.constant 0 : i32
    %c0_i32_0 = arith.constant 0 : i32
    %c0_i32_1 = arith.constant 0 : i32
    return %arg0, %c0_i32, %c0_i32_0 : i32, i32, i32
  }
}

</mosaic_0001>

<llo_original>
// kernel: tpu_custom_call.1
$region0: #{tpu_custom_call.1}
  #allocation0 [shape = 'u32[]', space=smem, size = 0x4, offset = 0x4, fixed_abs, tag = 'smem constant byte address 0x4 - core index']
  #allocation1 [shape = 'u32[72,128]{1,0:T(1,128)}', space=vmem, size = 0x9000, scoped, tag = 'internal scratch']
  %s0 = inlined_call_operand.hbm [shape: f32[16,1024], index: 0, kind: input, shape index: {}]
  %s1 = inlined_call_operand.hbm [shape: f32[16,1024], index: 1, kind: input, shape index: {}]
  %s2 = inlined_call_operand.hbm [shape: f32[2,8,1024], index: 2, kind: output, shape index: {}]
  %s3 = sld [smem:[#allocation0]]
  $region53: #{tpu_custom_call.1} parent=0
    _
  %s5 = ssub.s32 1, %s3
  %s6 = scalar_select 0, %s5, %s3
  $region1: #{tpu_custom_call.1} parent=0
    #allocation2 [shape = 'u8[65536]{0}', space=vmem, size = 0x10000, scoped, tag = 'input window, operand 0']
    #allocation3 [shape = 's32[2]{0}', space=sflag, size = 0x8, scoped, tag = 'scoped memory for tpu_custom_call.1']
    #allocation4 [shape = 's32[2]{0}', space=sflag, size = 0x8, scoped, tag = 'scoped memory for tpu_custom_call.1']
    #allocation5 [shape = 'u8[65536]{0}', space=vmem, size = 0x10000, scoped, tag = 'input window, operand 1']
    #allocation6 [shape = 's32[2]{0}', space=sflag, size = 0x8, scoped, tag = 'scoped memory for tpu_custom_call.1']
    #allocation7 [shape = 'u8[65536]{0}', space=vmem, size = 0x10000, scoped, tag = 'output window, operand 0']
    %7 = vsyncpa [#allocation3], 0
    %s8 = scalar_lea.sflag [#allocation3], 1
    %9 = vsyncpa %s8, 0
    %10 = vsyncpa [#allocation6], 0
    %s11 = scalar_lea.sflag [#allocation6], 1
    %12 = vsyncpa %s11, 0
    %13 = vsyncpa [#allocation4], 0
    %s14 = scalar_lea.sflag [#allocation4], 1
    %15 = vsyncpa %s14, 0
    loop: start=0, step=1, limit=4
    $region2: #{tpu_custom_call.1} parent=1 // loop_pre_header
      _
    $region3: #{tpu_custom_call.1} parent=1 // loop_header
      %s17 = sphi 0, %s21
      %p18 = scmp.ge.s32.totalorder %s17, 4
      %s24 = sphi 0, %s36
      %s25 = sphi 0, %s32
      %s26 = sphi 0, %s24
      %s27 = sphi 0, %s25
      %s28 = sphi 0, %s26
      %s29 = sphi 0, %s27
      %s41 = sphi 0, %s43
      %s44 = sphi 0, %s41
      %s45 = sphi 0, %s44
      %s61 = sphi 0, %s45
      %s69 = sphi 0, %s71
      %s72 = sphi 0, %s69
      %s73 = sphi 0, %s72
      %s89 = sphi 0, %s73
      %s95 = sphi 0, %s97
      %s98 = sphi 0, %s95
      %s99 = sphi 0, %s98
      %s115 = sphi 0, %s99
    $region4: #{tpu_custom_call.1} parent=1 // loop_header_branch
      %20 = sbr.rel (%p18) target = $region8
    $region5: #{tpu_custom_call.1} parent=1 // loop_body
      %s22 = ssub.s32 %s17, 1
      %s23 = ssub.s32 %s17, 2
      %s30 = sadd.s32 1, %s25
      %p31 = scmp.ge.s32.totalorder %s30, 1
      %s32 = scalar_select %p31, 0, %s30
      %s33 = sadd.s32 1, %s24
      %s34 = scalar_select %p31, %s33, %s24
      %p35 = scmp.ge.s32.totalorder %s34, 2
      %s36 = scalar_select %p35, 0, %s34
      %s37 = sadd.s32 %s24, %s25
      %s38 = sadd.s32 %s36, %s32
      %s39 = ssub.s32 %s37, %s38
      %p40 = scmp.eq.s32.totalorder %s39, 0
      %s42 = sadd.s32 %s41, 1
      %s43 = scalar_select %p40, %s41, %s42
      %p46 = pneg %p40
      %p47 = scmp.eq.s32.totalorder %s17, 1
      %p48 = por %p46, %p47
      %p49 = scmp.ne.s32.totalorder %s41, %s44
      %p50 = scmp.eq.s32.totalorder %s17, 0
      %p51 = por %p49, %p50
      %p52 = scmp.ne.s32.totalorder %s41, %s44
      %p53 = scmp.eq.s32.totalorder %s22, 1
      %p54 = por %p52, %p53
      %p55 = scmp.ne.s32.totalorder %s44, %s45
      %p56 = scmp.eq.s32.totalorder %s22, 0
      %p57 = por %p55, %p56
      %p58 = scmp.ne.s32.totalorder %s44, %s45
      %p59 = scmp.eq.s32.totalorder %s23, 1
      %p60 = por %p58, %p59
      %p62 = scmp.ne.s32.totalorder %s45, %s61
      %p63 = scmp.eq.s32.totalorder %s23, 0
      %p64 = por %p62, %p63
      %s65 = sadd.s32 %s24, %s25
      %s66 = sadd.s32 %s36, %s32
      %s67 = ssub.s32 %s65, %s66
      %p68 = scmp.eq.s32.totalorder %s67, 0
      %s70 = sadd.s32 %s69, 1
      %s71 = scalar_select %p68, %s69, %s70
      %p74 = pneg %p68
      %p75 = scmp.eq.s32.totalorder %s17, 1
      %p76 = por %p74, %p75
      %p77 = scmp.ne.s32.totalorder %s69, %s72
      %p78 = scmp.eq.s32.totalorder %s17, 0
      %p79 = por %p77, %p78
      %p80 = scmp.ne.s32.totalorder %s69, %s72
      %p81 = scmp.eq.s32.totalorder %s22, 1
      %p82 = por %p80, %p81
      %p83 = scmp.ne.s32.totalorder %s72, %s73
      %p84 = scmp.eq.s32.totalorder %s22, 0
      %p85 = por %p83, %p84
      %p86 = scmp.ne.s32.totalorder %s72, %s73
      %p87 = scmp.eq.s32.totalorder %s23, 1
      %p88 = por %p86, %p87
      %p90 = scmp.ne.s32.totalorder %s73, %s89
      %p91 = scmp.eq.s32.totalorder %s23, 0
      %p92 = por %p90, %p91
      %s93 = ssub.s32 %s24, %s36
      %p94 = scmp.eq.s32.totalorder %s93, 0
      %s96 = sadd.s32 %s95, 1
      %s97 = scalar_select %p94, %s95, %s96
      %p100 = pneg %p94
      %p101 = scmp.eq.s32.totalorder %s17, 1
      %p102 = por %p100, %p101
      %p103 = scmp.ne.s32.totalorder %s95, %s98
      %p104 = scmp.eq.s32.totalorder %s17, 0
      %p105 = por %p103, %p104
      %p106 = scmp.ne.s32.totalorder %s95, %s98
      %p107 = scmp.eq.s32.totalorder %s22, 1
      %p108 = por %p106, %p107
      %p109 = scmp.ne.s32.totalorder %s98, %s99
      %p110 = scmp.eq.s32.totalorder %s22, 0
      %p111 = por %p109, %p110
      %p112 = scmp.ne.s32.totalorder %s98, %s99
      %p113 = scmp.eq.s32.totalorder %s23, 1
      %p114 = por %p112, %p113
      %p116 = scmp.ne.s32.totalorder %s99, %s115
      %p117 = scmp.eq.s32.totalorder %s23, 0
      %p118 = por %p116, %p117
      %p119 = scmp.le.s32.totalorder 1, %s17
      %p120 = scmp.lt.s32.totalorder %s17, 3
      %p121 = pnand %p119, %p120
      %p122 = pneg %p121
      // Predicated region
      $region9: #{tpu_custom_call.1} parent=5 // pred_check
        _
      $region10: #{tpu_custom_call.1} parent=5 // pred_check_branch
        %124 = sbr.rel (%p121) target = $region12
      $region11: #{tpu_custom_call.1} parent=5 // pred_region
        %s125 = ssub.s32 %s17, 1
      $region12: #{tpu_custom_call.1} parent=5 // pred_fallthru
        _
      %p126 = scmp.lt.s32.totalorder %s17, 2
      // Predicated region
      $region13: #{tpu_custom_call.1} parent=5 // pred_check
        %p127 = pneg %p126
      $region14: #{tpu_custom_call.1} parent=5 // pred_check_branch
        %129 = sbr.rel (%p127) target = $region16
      $region15: #{tpu_custom_call.1} parent=5 // pred_region
        // Predicated region
        $region17: #{tpu_custom_call.1} parent=15 // pred_check
          %p130 = pneg %p51
        $region18: #{tpu_custom_call.1} parent=15 // pred_check_branch
          %132 = sbr.rel (%p130) target = $region20
        $region19: #{tpu_custom_call.1} parent=15 // pred_region
          %s133 = sand.u32 %s41, 1
          %s134 = scalar_lea.sflag [#allocation3], %s133
          %s135 = sand.u32 %s41, 1
          %s136 = smul.addr %s135, 64
          %s137 = scalar_lea.vmem [#allocation2], %s136
          %s138 = sadd.s32 %s24, %s25
          %140 = vsyncadd %s134, 0
          %s141 = smul.addr %s138, 8
          %s142 = smul.addr %s141, 8
          %s143 = scalar_lea.hbm %s0, %s142
          %s145 = sshll.u32 %s143, 4
          %s146 = int_to_ptr.hbm [resolvable:$true] %s145
          %s147 = sshll.u32 %s137, 4
          %s148 = int_to_ptr.vmem [resolvable:$true] %s147
          %150 = dma.hbm_to_vmem [thread:$0]  %s146, 1024, %s148, %s134
        $region20: #{tpu_custom_call.1} parent=15 // pred_fallthru
          _
        // Predicated region
        $region21: #{tpu_custom_call.1} parent=15 // pred_check
          %p151 = pneg %p79
        $region22: #{tpu_custom_call.1} parent=15 // pred_check_branch
          %153 = sbr.rel (%p151) target = $region24
        $region23: #{tpu_custom_call.1} parent=15 // pred_region
          %s154 = sand.u32 %s69, 1
          %s155 = scalar_lea.sflag [#allocation6], %s154
          %s156 = sand.u32 %s69, 1
          %s157 = smul.addr %s156, 64
          %s158 = scalar_lea.vmem [#allocation5], %s157
          %s159 = sadd.s32 %s24, %s25
          %161 = vsyncadd %s155, 0
          %s162 = smul.addr %s159, 8
          %s163 = smul.addr %s162, 8
          %s164 = scalar_lea.hbm %s1, %s163
          %s166 = sshll.u32 %s164, 4
          %s167 = int_to_ptr.hbm [resolvable:$true] %s166
          %s168 = sshll.u32 %s158, 4
          %s169 = int_to_ptr.vmem [resolvable:$true] %s168
          %171 = dma.hbm_to_vmem [thread:$0]  %s167, 1024, %s169, %s155
        $region24: #{tpu_custom_call.1} parent=15 // pred_fallthru
          _
      $region16: #{tpu_custom_call.1} parent=5 // pred_fallthru
        _
      %p172 = scmp.le.s32.totalorder 1, %s17
      %p173 = scmp.lt.s32.totalorder %s17, 3
      %p174 = pnand %p172, %p173
      %p175 = pneg %p174
      // Predicated region
      $region25: #{tpu_custom_call.1} parent=5 // pred_check
        _
      $region26: #{tpu_custom_call.1} parent=5 // pred_check_branch
        %177 = sbr.rel (%p174) target = $region28
      $region27: #{tpu_custom_call.1} parent=5 // pred_region
        %s178 = ssub.s32 %s17, 1
        %s179 = sand.u32 %s44, 1
        %s180 = scalar_lea.sflag [#allocation3], %s179
        %s181 = sand.u32 %s44, 1
        %s182 = smul.addr %s181, 64
        %s183 = scalar_lea.vmem [#allocation2], %s182
        // Predicated region
        $region29: #{tpu_custom_call.1} parent=27 // pred_check
          %p184 = pneg %p57
        $region30: #{tpu_custom_call.1} parent=27 // pred_check_branch
          %186 = sbr.rel (%p184) target = $region32
        $region31: #{tpu_custom_call.1} parent=27 // pred_region
          %188 = dma.done %s180, 1024
        $region32: #{tpu_custom_call.1} parent=27 // pred_fallthru
          _
        %s189 = sand.u32 %s72, 1
        %s190 = scalar_lea.sflag [#allocation6], %s189
        %s191 = sand.u32 %s72, 1
        %s192 = smul.addr %s191, 64
        %s193 = scalar_lea.vmem [#allocation5], %s192
        // Predicated region
        $region33: #{tpu_custom_call.1} parent=27 // pred_check
          %p194 = pneg %p85
        $region34: #{tpu_custom_call.1} parent=27 // pred_check_branch
          %196 = sbr.rel (%p194) target = $region36
        $region35: #{tpu_custom_call.1} parent=27 // pred_region
          %198 = dma.done %s190, 1024
        $region36: #{tpu_custom_call.1} parent=27 // pred_fallthru
          _
        %s199 = sand.u32 %s44, 1
        %s200 = scalar_lea.sflag [#allocation3], %s199
        %s201 = sand.u32 %s44, 1
        %s202 = smul.addr %s201, 64
        %s203 = scalar_lea.vmem [#allocation2], %s202
        %p204 = pneg %p57
        %p205 = pneg %p54
        %s206 = sand.u32 %s72, 1
        %s207 = scalar_lea.sflag [#allocation6], %s206
        %s208 = sand.u32 %s72, 1
        %s209 = smul.addr %s208, 64
        %s210 = scalar_lea.vmem [#allocation5], %s209
        %p211 = pneg %p85
        %p212 = pneg %p82
        %p213 = pneg %p111
        %p214 = pneg %p108
        %s215 = sand.u32 %s98, 1
        %s216 = scalar_lea.sflag [#allocation4], %s215
        %s217 = sand.u32 %s98, 1
        %s218 = smul.addr %s217, 64
        %s219 = scalar_lea.vmem [#allocation7], %s218
        %s220 = sadd.s32 %s26, %s27
        %s221 = sadd.s32 %s26, %s27
        %p222 = scmp.eq.s32.totalorder %s27, 0
        // Predicated region
        $region37: #{tpu_custom_call.1} parent=27 // pred_check
          %p223 = pneg %p222
        $region38: #{tpu_custom_call.1} parent=27 // pred_check_branch
          %225 = sbr.rel (%p223) target = $region40
        $region39: #{tpu_custom_call.1} parent=27 // pred_region
          %226 = vst [vmem:[%s219] sm:$0xff] 0.0
          %227 = vst [vmem:[%s219 + $0x8] sm:$0xff] 0.0
          %228 = vst [vmem:[%s219 + $0x10] sm:$0xff] 0.0
          %229 = vst [vmem:[%s219 + $0x18] sm:$0xff] 0.0
          %230 = vst [vmem:[%s219 + $0x20] sm:$0xff] 0.0
          %231 = vst [vmem:[%s219 + $0x28] sm:$0xff] 0.0
          %232 = vst [vmem:[%s219 + $0x30] sm:$0xff] 0.0
          %233 = vst [vmem:[%s219 + $0x38] sm:$0xff] 0.0
        $region40: #{tpu_custom_call.1} parent=27 // pred_fallthru
          _
        %v234 = vld [vmem:[%s183] sm:$0xff]
        %v235 = vld [vmem:[%s183 + $0x8] sm:$0xff]
        %v236 = vld [vmem:[%s183 + $0x10] sm:$0xff]
        %v237 = vld [vmem:[%s183 + $0x18] sm:$0xff]
        %v238 = vld [vmem:[%s183 + $0x20] sm:$0xff]
        %v239 = vld [vmem:[%s183 + $0x28] sm:$0xff]
        %v240 = vld [vmem:[%s183 + $0x30] sm:$0xff]
        %v241 = vld [vmem:[%s183 + $0x38] sm:$0xff]
        %v242 = vmax.f32 %v234, 1e-09
        %v243 = vmax.f32 %v235, 1e-09
        %v244 = vmax.f32 %v236, 1e-09
        %v245 = vmax.f32 %v237, 1e-09
        %v246 = vmax.f32 %v238, 1e-09
        %v247 = vmax.f32 %v239, 1e-09
        %v248 = vmax.f32 %v240, 1e-09
        %v249 = vmax.f32 %v241, 1e-09
        %v250 = vmin.f32 %v242, 1.0
        %v251 = vmin.f32 %v243, 1.0
        %v252 = vmin.f32 %v244, 1.0
        %v253 = vmin.f32 %v245, 1.0
        %v254 = vmin.f32 %v246, 1.0
        %v255 = vmin.f32 %v247, 1.0
        %v256 = vmin.f32 %v248, 1.0
        %v257 = vmin.f32 %v249, 1.0
        %v258 = vld [vmem:[%s193] sm:$0xff]
        %v259 = vld [vmem:[%s193 + $0x8] sm:$0xff]
        %v260 = vld [vmem:[%s193 + $0x10] sm:$0xff]
        %v261 = vld [vmem:[%s193 + $0x18] sm:$0xff]
        %v262 = vld [vmem:[%s193 + $0x20] sm:$0xff]
        %v263 = vld [vmem:[%s193 + $0x28] sm:$0xff]
        %v264 = vld [vmem:[%s193 + $0x30] sm:$0xff]
        %v265 = vld [vmem:[%s193 + $0x38] sm:$0xff]
        %v266 = vmax.f32 %v258, 1e-09
        %v267 = vmax.f32 %v259, 1e-09
        %v268 = vmax.f32 %v260, 1e-09
        %v269 = vmax.f32 %v261, 1e-09
        %v270 = vmax.f32 %v262, 1e-09
        %v271 = vmax.f32 %v263, 1e-09
        %v272 = vmax.f32 %v264, 1e-09
        %v273 = vmax.f32 %v265, 1e-09
        %v274 = vmin.f32 %v266, 1.0
        %v275 = vmin.f32 %v267, 1.0
        %v276 = vmin.f32 %v268, 1.0
        %v277 = vmin.f32 %v269, 1.0
        %v278 = vmin.f32 %v270, 1.0
        %v279 = vmin.f32 %v271, 1.0
        %v280 = vmin.f32 %v272, 1.0
        %v281 = vmin.f32 %v273, 1.0
        %v282 = vlog2.pop %v250
        %v283 = vmul.f32 %v282, 0.6931472
        %v284 = vlog2.pop %v251
        %v285 = vmul.f32 %v284, 0.6931472
        %v286 = vlog2.pop %v252
        %v287 = vmul.f32 %v286, 0.6931472
        %v288 = vlog2.pop %v253
        %v289 = vmul.f32 %v288, 0.6931472
        %v290 = vlog2.pop %v254
        %v291 = vmul.f32 %v290, 0.6931472
        %v292 = vlog2.pop %v255
        %v293 = vmul.f32 %v292, 0.6931472
        %v294 = vlog2.pop %v256
        %v295 = vmul.f32 %v294, 0.6931472
        %v296 = vlog2.pop %v257
        %v297 = vmul.f32 %v296, 0.6931472
        %v298 = vmul.f32 %v274, %v283
        %v299 = vmul.f32 %v275, %v285
        %v300 = vmul.f32 %v276, %v287
        %v301 = vmul.f32 %v277, %v289
        %v302 = vmul.f32 %v278, %v291
        %v303 = vmul.f32 %v279, %v293
        %v304 = vmul.f32 %v280, %v295
        %v305 = vmul.f32 %v281, %v297
        %v306 = vsub.f32 1.0, %v250
        %v307 = vsub.f32 1.0, %v251
        %v308 = vsub.f32 1.0, %v252
        %v309 = vsub.f32 1.0, %v253
        %v310 = vsub.f32 1.0, %v254
        %v311 = vsub.f32 1.0, %v255
        %v312 = vsub.f32 1.0, %v256
        %v313 = vsub.f32 1.0, %v257
        %v314 = vmul.f32 %v306, %v306
        %v315 = vmul.f32 %v307, %v307
        %v316 = vmul.f32 %v308, %v308
        %v317 = vmul.f32 %v309, %v309
        %v318 = vmul.f32 %v310, %v310
        %v319 = vmul.f32 %v311, %v311
        %v320 = vmul.f32 %v312, %v312
        %v321 = vmul.f32 %v313, %v313
        %v322 = vmul.f32 %v274, %v314
        %v323 = vmul.f32 %v275, %v315
        %v324 = vmul.f32 %v276, %v316
        %v325 = vmul.f32 %v277, %v317
        %v326 = vmul.f32 %v278, %v318
        %v327 = vmul.f32 %v279, %v319
        %v328 = vmul.f32 %v280, %v320
        %v329 = vmul.f32 %v281, %v321
        %v330 = vmul.f32 %v322, -0.25
        %v331 = vmul.f32 %v323, -0.25
        %v332 = vmul.f32 %v324, -0.25
        %v333 = vmul.f32 %v325, -0.25
        %v334 = vmul.f32 %v326, -0.25
        %v335 = vmul.f32 %v327, -0.25
        %v336 = vmul.f32 %v328, -0.25
        %v337 = vmul.f32 %v329, -0.25
        %v338 = vmul.f32 %v330, %v298
        %v339 = vmul.f32 %v331, %v299
        %v340 = vmul.f32 %v332, %v300
        %v341 = vmul.f32 %v333, %v301
        %v342 = vmul.f32 %v334, %v302
        %v343 = vmul.f32 %v335, %v303
        %v344 = vmul.f32 %v336, %v304
        %v345 = vmul.f32 %v337, %v305
        %s346 = sadd.s32 %s26, %s27
        %v347 = vlaneseq
        %v348 = vshrl.u32 %v347, 7
        %s349 = smul.u32 %s346, 8
        %v350 = vstv %s349
        %v351 = vadd.s32 %v348, %v350
        %v352 = vlaneseq
        %v353 = vand.u32 %v352, 127
        %v354 = vadd.s32 %v353, 128
        %v355 = vadd.s32 %v353, 256
        %v356 = vadd.s32 %v353, 384
        %v357 = vadd.s32 %v353, 512
        %v358 = vadd.s32 %v353, 640
        %v359 = vadd.s32 %v353, 768
        %v360 = vadd.s32 %v353, 896
        %v361 = vmul.u32 %v351, 1024
        %v362 = vadd.s32 %v361, %v353
        %v363 = vadd.s32 %v361, %v354
        %v364 = vadd.s32 %v361, %v355
        %v365 = vadd.s32 %v361, %v356
        %v366 = vadd.s32 %v361, %v357
        %v367 = vadd.s32 %v361, %v358
        %v368 = vadd.s32 %v361, %v359
        %v369 = vadd.s32 %v361, %v360
        %vm370 = vcmp.lt.s32.totalorder %v362, 2048
        %vm371 = vcmp.lt.s32.totalorder %v363, 2048
        %vm372 = vcmp.lt.s32.totalorder %v364, 2048
        %vm373 = vcmp.lt.s32.totalorder %v365, 2048
        %vm374 = vcmp.lt.s32.totalorder %v366, 2048
        %vm375 = vcmp.lt.s32.totalorder %v367, 2048
        %vm376 = vcmp.lt.s32.totalorder %v368, 2048
        %vm377 = vcmp.lt.s32.totalorder %v369, 2048
        %v378 = vsel %vm370, %v338, 0.0
        %v379 = vsel %vm371, %v339, 0.0
        %v380 = vsel %vm372, %v340, 0.0
        %v381 = vsel %vm373, %v341, 0.0
        %v382 = vsel %vm374, %v342, 0.0
        %v383 = vsel %vm375, %v343, 0.0
        %v384 = vsel %vm376, %v344, 0.0
        %v385 = vsel %vm377, %v345, 0.0
        %v386 = vadd.f32 %v378, 0.0
        %v387 = vadd.f32 %v379, 0.0
        %v388 = vadd.f32 %v380, 0.0
        %v389 = vadd.f32 %v381, 0.0
        %v390 = vadd.f32 %v382, 0.0
        %v391 = vadd.f32 %v383, 0.0
        %v392 = vadd.f32 %v384, 0.0
        %v393 = vadd.f32 %v385, 0.0
        %v394 = vld [vmem:[%s219] sm:$0xff]
        %v395 = vld [vmem:[%s219 + $0x8] sm:$0xff]
        %v396 = vld [vmem:[%s219 + $0x10] sm:$0xff]
        %v397 = vld [vmem:[%s219 + $0x18] sm:$0xff]
        %v398 = vld [vmem:[%s219 + $0x20] sm:$0xff]
        %v399 = vld [vmem:[%s219 + $0x28] sm:$0xff]
        %v400 = vld [vmem:[%s219 + $0x30] sm:$0xff]
        %v401 = vld [vmem:[%s219 + $0x38] sm:$0xff]
        %v402 = vadd.f32 %v394, %v386
        %v403 = vadd.f32 %v395, %v387
        %v404 = vadd.f32 %v396, %v388
        %v405 = vadd.f32 %v397, %v389
        %v406 = vadd.f32 %v398, %v390
        %v407 = vadd.f32 %v399, %v391
        %v408 = vadd.f32 %v400, %v392
        %v409 = vadd.f32 %v401, %v393
        %410 = vst [vmem:[%s219] sm:$0xff] %v402
        %411 = vst [vmem:[%s219 + $0x8] sm:$0xff] %v403
        %412 = vst [vmem:[%s219 + $0x10] sm:$0xff] %v404
        %413 = vst [vmem:[%s219 + $0x18] sm:$0xff] %v405
        %414 = vst [vmem:[%s219 + $0x20] sm:$0xff] %v406
        %415 = vst [vmem:[%s219 + $0x28] sm:$0xff] %v407
        %416 = vst [vmem:[%s219 + $0x30] sm:$0xff] %v408
        %417 = vst [vmem:[%s219 + $0x38] sm:$0xff] %v409
        %s418 = sand.u32 %s98, 1
        %s419 = scalar_lea.sflag [#allocation4], %s418
        %s420 = sand.u32 %s98, 1
        %s421 = smul.addr %s420, 64
        %s422 = scalar_lea.vmem [#allocation7], %s421
        // Predicated region
        $region41: #{tpu_custom_call.1} parent=27 // pred_check
          %p423 = pneg %p108
        $region42: #{tpu_custom_call.1} parent=27 // pred_check_branch
          %425 = sbr.rel (%p423) target = $region44
        $region43: #{tpu_custom_call.1} parent=27 // pred_region
          %427 = vsyncadd %s419, 0
          %s428 = smul.addr %s26, 8
          %s429 = smul.addr %s428, 8
          %s430 = scalar_lea.hbm %s2, %s429
          %s432 = sshll.u32 %s422, 4
          %s433 = int_to_ptr.vmem [resolvable:$true] %s432
          %s434 = sshll.u32 %s430, 4
          %s435 = int_to_ptr.hbm [resolvable:$true] %s434
          %437 = dma.vmem_to_hbm [thread:$0]  %s433, 1024, %s435, %s419
        $region44: #{tpu_custom_call.1} parent=27 // pred_fallthru
          _
      $region28: #{tpu_custom_call.1} parent=5 // pred_fallthru
        _
      %p438 = scmp.le.s32.totalorder 2, %s17
      // Predicated region
      $region45: #{tpu_custom_call.1} parent=5 // pred_check
        %p439 = pneg %p438
      $region46: #{tpu_custom_call.1} parent=5 // pred_check_branch
        %441 = sbr.rel (%p439) target = $region48
      $region47: #{tpu_custom_call.1} parent=5 // pred_region
        %s442 = ssub.s32 %s17, 2
        // Predicated region
        $region49: #{tpu_custom_call.1} parent=47 // pred_check
          %p443 = pneg %p114
        $region50: #{tpu_custom_call.1} parent=47 // pred_check_branch
          %445 = sbr.rel (%p443) target = $region52
        $region51: #{tpu_custom_call.1} parent=47 // pred_region
          %s446 = sand.u32 %s99, 1
          %s447 = scalar_lea.sflag [#allocation4], %s446
          %s448 = sand.u32 %s99, 1
          %s449 = smul.addr %s448, 64
          %s450 = scalar_lea.vmem [#allocation7], %s449
          %452 = dma.done %s447, 1024
        $region52: #{tpu_custom_call.1} parent=47 // pred_fallthru
          _
      $region48: #{tpu_custom_call.1} parent=5 // pred_fallthru
        _
    $region6: #{tpu_custom_call.1} parent=1 // loop_footer
      %s21 = sadd.s32 1, %s17
    $region7: #{tpu_custom_call.1} parent=1 // loop_footer_branch
      %16 = sbr.rel target = $region3
    $region8: #{tpu_custom_call.1} parent=1 // loop_exit
      _
    %453 = vsyncpa [#allocation3], 1
    %s454 = scalar_lea.sflag [#allocation3], 1
    %455 = vsyncpa %s454, 1
    %456 = vsyncpa [#allocation6], 1
    %s457 = scalar_lea.sflag [#allocation6], 1
    %458 = vsyncpa %s457, 1
    %459 = vsyncpa [#allocation4], 1
    %s460 = scalar_lea.sflag [#allocation4], 1
    %461 = vsyncpa %s460, 1

</llo_original>
